<compile_context>
chip_gen: v5e
topology: v5e:2x2
jax: 0.10.0
libtpu: 0.0.40
codegen_flags: <defaults>
</compile_context>

<pallas_src>
import functools
import math

import jax
import jax.numpy as jnp
from jax.experimental import pallas as pl
from jax.experimental.pallas import tpu as pltpu


MIN_LOG_STD = -20.0
MAX_LOG_STD = 2.0
_HALF_LOG_2PI = 0.5 * math.log(2.0 * math.pi)


def _round_up(x, m):
    return ((x + m - 1) // m) * m


def _vmem_bytes(shape, dtype):
    """Padded VMEM footprint of a 2-D array: sublane->8/16, lane->128."""
    itemsize = jnp.dtype(dtype).itemsize
    rows = shape[0] if len(shape) > 1 else 1
    cols = shape[-1]
    sub = max(8, 32 // itemsize)               # f32: 8 sublanes, bf16: 16
    return _round_up(rows, sub) * _round_up(cols, 128) * itemsize


def _actor_sac_kernel(xe_ref, w1_ref, b1_ref, w2_ref, b2_ref, wh_ref, bh_ref,
                      *out_refs, n_states, n_actions, evaluate, with_logprob):
    action_ref = out_refs[0]

    # --- feature MLP: ReLU(Linear) -> ReLU(Linear); bf16 MXU, f32 accumulate.
    x = xe_ref[:, :n_states].astype(jnp.bfloat16)
    h1 = jnp.dot(x, w1_ref[...], preferred_element_type=jnp.float32) + b1_ref[...]
    h1 = jnp.maximum(h1, 0.0)
    h2 = jnp.dot(h1.astype(jnp.bfloat16), w2_ref[...],
                 preferred_element_type=jnp.float32) + b2_ref[...]
    h2 = jnp.maximum(h2, 0.0)

    # --- fused mu / log_std head: one (hidden, 2*n_actions) matmul.
    head = jnp.dot(h2.astype(jnp.bfloat16), wh_ref[...],
                   preferred_element_type=jnp.float32) + bh_ref[...]
    mu = head[:, :n_actions]

    # Sampling path is only needed when we act stochastically or need log_prob.
    need_sample = (not evaluate) or with_logprob
    if need_sample:
        log_std = jnp.clip(head[:, n_actions:], MIN_LOG_STD, MAX_LOG_STD)
        eps = xe_ref[:, n_states:]                       # (z - mu)/std == eps

    if evaluate:
        action = jnp.tanh(mu)
    else:
        z = mu + jnp.exp(log_std) * eps                  # rsample
        action = jnp.tanh(z)
    action_ref[...] = action

    if with_logprob:
        # Normal(mu, std).log_prob(z) with (z - mu)/std == eps by construction.
        normal_lp = -0.5 * eps * eps - log_std - _HALF_LOG_2PI
        # Matches the PyTorch module: - log(1 - action^2 + 1e-7).
        log_det = jnp.log(1.0 - action * action + 1e-7)
        out_refs[1][...] = jnp.sum(normal_lp - log_det, axis=-1, keepdims=True)


def prepare_params(params):
    """One-time conversion of PyTorch-layout f32 params to kernel layout:
    (in, out) bf16 weights, (1, out) f32 biases, fused mu/log_std head."""
    w_head = jnp.concatenate([params["w_mu"], params["w_log_std"]], axis=0)
    b_head = jnp.concatenate([params["b_mu"], params["b_log_std"]], axis=0)
    return {
        "w1": params["w1"].T.astype(jnp.bfloat16),
        "b1": params["b1"][None, :].astype(jnp.float32),
        "w2": params["w2"].T.astype(jnp.bfloat16),
        "b2": params["b2"][None, :].astype(jnp.float32),
        "w_head": w_head.T.astype(jnp.bfloat16),      # (hidden, 2*n_actions)
        "b_head": b_head[None, :].astype(jnp.float32),
    }


@functools.partial(jax.jit, static_argnames=("evaluate", "with_logprob", "block_b"))
def actor_sac_forward(state, kparams, eps, *, evaluate=False, with_logprob=True,
                      block_b=512):
    """state: (B, n_states) f32, eps: (B, n_actions) f32 ~ N(0,1).
    Returns (action (B, n_actions), log_prob (B, 1) or None)."""
    B, n_states = state.shape
    n_actions = eps.shape[-1]
    hidden = kparams["w1"].shape[1]
    two_na = kparams["b_head"].shape[-1]
    in_dim = n_states + n_actions

    # Batch tile: multiple of 16 (bf16 MXU-LHS sublane tile); keep >= 2 grid
    # steps when the batch allows it so v7x can use both TensorCores.
    b16 = _round_up(max(B, 1), 16)
    if b16 >= 32:
        b_tile = min(block_b, _round_up(b16 // 2, 16))
    else:
        b_tile = b16
    padded_b = _round_up(B, b_tile)

    # One packed per-tile input slab [state | eps] -> one DMA per grid step.
    slab = jnp.concatenate([state, eps], axis=-1)
    if padded_b != B:
        slab = jnp.pad(slab, ((0, padded_b - B), (0, 0)))

    grid = (padded_b // b_tile,)
    batch_spec = lambda last: pl.BlockSpec((b_tile, last), lambda i: (i, 0))
    # Weights/biases: constant index_map -> keep VMEM-resident, single-buffered.
    resident = lambda shape: pl.BlockSpec(shape, lambda i: (0, 0),
                                          pipeline_mode=pl.Buffered(1))

    # Explicit VMEM budget from padded buffer sizes (weights are duplicated
    # per TensorCore on v7x under "parallel"; clamp to [32 MiB, 64 MiB/TC]).
    weight_bytes = (
        _vmem_bytes((n_states, hidden), jnp.bfloat16)
        + _vmem_bytes((hidden, hidden), jnp.bfloat16)
        + _vmem_bytes((hidden, two_na), jnp.bfloat16)
        + _vmem_bytes((1, hidden), jnp.float32) * 2
        + _vmem_bytes((1, two_na), jnp.float32)
    )
    io_bytes = 2 * _vmem_bytes((b_tile, in_dim), jnp.float32)        # input (dbl-buf)
    io_bytes += 2 * _vmem_bytes((b_tile, n_actions), jnp.float32)    # action out
    if with_logprob:
        io_bytes += 2 * _vmem_bytes((b_tile, 1), jnp.float32)        # log_prob out
    interm_bytes = (3 * _vmem_bytes((b_tile, hidden), jnp.float32)
                    + 4 * _vmem_bytes((b_tile, two_na), jnp.float32))
    needed = weight_bytes + io_bytes + interm_bytes
    vmem_limit = int(min(max(2 * needed, 32 << 20), 64 << 20))

    kernel = functools.partial(_actor_sac_kernel, n_states=n_states,
                               n_actions=n_actions, evaluate=evaluate,
                               with_logprob=with_logprob)

    if with_logprob:
        out_shape = (jax.ShapeDtypeStruct((padded_b, n_actions), jnp.float32),
                     jax.ShapeDtypeStruct((padded_b, 1), jnp.float32))
        out_specs = (batch_spec(n_actions), batch_spec(1))
    else:
        out_shape = jax.ShapeDtypeStruct((padded_b, n_actions), jnp.float32)
        out_specs = batch_spec(n_actions)

    out = pl.pallas_call(
        kernel,
        out_shape=out_shape,
        grid_spec=pltpu.PrefetchScalarGridSpec(
            num_scalar_prefetch=0,
            grid=grid,
            in_specs=[
                batch_spec(in_dim),              # [state | eps] tile (pipelined)
                resident((n_states, hidden)),    # w1  (VMEM-resident, 1 buffer)
                resident((1, hidden)),           # b1
                resident((hidden, hidden)),      # w2
                resident((1, hidden)),           # b2
                resident((hidden, two_na)),      # fused head weight
                resident((1, two_na)),           # fused head bias
            ],
            out_specs=out_specs,
        ),
        compiler_params=pltpu.CompilerParams(
            dimension_semantics=("parallel",),   # 2nd TC on v7x megacore
            vmem_limit_bytes=vmem_limit),
    )(slab, kparams["w1"], kparams["b1"], kparams["w2"], kparams["b2"],
      kparams["w_head"], kparams["b_head"])

    if with_logprob:
        action, log_prob = out
        return action[:B], log_prob[:B]
    return out[:B], None


def _reference_forward(state, kparams, eps, *, evaluate=False, with_logprob=True):
    """Pure-JAX mirror of the kernel math (same bf16 matmul inputs)."""
    bf16 = jnp.bfloat16
    h1 = jnp.maximum(jnp.dot(state.astype(bf16), kparams["w1"],
                             preferred_element_type=jnp.float32) + kparams["b1"], 0.0)
    h2 = jnp.maximum(jnp.dot(h1.astype(bf16), kparams["w2"],
                             preferred_element_type=jnp.float32) + kparams["b2"], 0.0)
    head = jnp.dot(h2.astype(bf16), kparams["w_head"],
                   preferred_element_type=jnp.float32) + kparams["b_head"]
    n_actions = head.shape[-1] // 2
    mu = head[:, :n_actions]
    log_std = jnp.clip(head[:, n_actions:], MIN_LOG_STD, MAX_LOG_STD)
    z = mu + jnp.exp(log_std) * eps
    action = jnp.tanh(mu) if evaluate else jnp.tanh(z)
    if not with_logprob:
        return action, None
    normal_lp = -0.5 * eps * eps - log_std - _HALF_LOG_2PI
    log_det = jnp.log(1.0 - action * action + 1e-7)
    log_prob = jnp.sum(normal_lp - log_det, axis=-1, keepdims=True)
    return action, log_prob


def _orthogonal(key, shape, gain=1.0):
    """Deterministic orthogonal init matching nn.init.orthogonal_ semantics."""
    rows, cols = shape
    n = max(rows, cols)
    a = jax.random.normal(key, (n, n), dtype=jnp.float32)
    q, r = jnp.linalg.qr(a)
    q = q * jnp.sign(jnp.diag(r))[None, :]
    return gain * q[:rows, :cols]


def init_params(key, n_states, n_actions, hidden_units, std=1.0, bias_const=1e-06):
    k1, k2, k3, k4 = jax.random.split(key, 4)
    return {
        "w1": _orthogonal(k1, (hidden_units, n_states), std),
        "b1": jnp.full((hidden_units,), bias_const, jnp.float32),
        "w2": _orthogonal(k2, (hidden_units, hidden_units), std),
        "b2": jnp.full((hidden_units,), bias_const, jnp.float32),
        "w_mu": _orthogonal(k3, (n_actions, hidden_units), std),
        "b_mu": jnp.full((n_actions,), bias_const, jnp.float32),
        "w_log_std": _orthogonal(k4, (n_actions, hidden_units), std),
        "b_log_std": jnp.full((n_actions,), bias_const, jnp.float32),
    }


if __name__ == "__main__":
    B, n_states, hidden_units, n_actions = 2, 16, 32, 4

    key = jax.random.PRNGKey(0)
    k_params, k_state, k_eps = jax.random.split(key, 3)

    params = init_params(k_params, n_states, n_actions, hidden_units)
    kparams = prepare_params(params)  # one-time layout/dtype conversion
    state = jax.random.normal(k_state, (B, n_states), dtype=jnp.float32)
    eps = jax.random.normal(k_eps, (B, n_actions), dtype=jnp.float32)

    for evaluate in (False, True):
        for with_logprob in (True, False):
            action, log_prob = actor_sac_forward(
                state, kparams, eps, evaluate=evaluate, with_logprob=with_logprob)
            jax.block_until_ready(action)

            a_ref, lp_ref = _reference_forward(
                state, kparams, eps, evaluate=evaluate, with_logprob=with_logprob)

            assert action.shape == (B, n_actions)
            assert bool(jnp.all(jnp.isfinite(action)))
            assert bool(jnp.allclose(action, a_ref, atol=5e-3, rtol=5e-3))
            if with_logprob:
                assert log_prob.shape == (B, 1)
                assert bool(jnp.all(jnp.isfinite(log_prob)))
                assert bool(jnp.allclose(log_prob, lp_ref, atol=5e-3, rtol=5e-3))
            else:
                assert log_prob is None

    print("KERNEL_OK")
</pallas_src>

<mosaic_0001>
module attributes {stable_mosaic.version = 11 : i64} {
  func.func @_actor_sac_kernel(%arg0: i32, %arg1: memref<16x20xf32, #tpu.memory_space<vmem>>, %arg2: memref<16x32xbf16, #tpu.memory_space<vmem>>, %arg3: memref<1x32xf32, #tpu.memory_space<vmem>>, %arg4: memref<32x32xbf16, #tpu.memory_space<vmem>>, %arg5: memref<1x32xf32, #tpu.memory_space<vmem>>, %arg6: memref<32x8xbf16, #tpu.memory_space<vmem>>, %arg7: memref<1x8xf32, #tpu.memory_space<vmem>>, %arg8: memref<16x4xf32, #tpu.memory_space<vmem>>, %arg9: memref<16x1xf32, #tpu.memory_space<vmem>>) attributes {dimension_semantics = [#tpu.dimension_semantics<parallel>], iteration_bounds = array<i64: 1>, scalar_prefetch = 0 : i64, scratch_operands = 0 : i64, tpu.core_type = #tpu.core_type<tc>, window_params = [{transform_indices = @transform_0, window_bounds = array<i64: 16, 20>}, {pipeline_mode = #tpu.pipeline_mode<synchronous>, transform_indices = @transform_1, window_bounds = array<i64: 16, 32>}, {pipeline_mode = #tpu.pipeline_mode<synchronous>, transform_indices = @transform_2, window_bounds = array<i64: 1, 32>}, {pipeline_mode = #tpu.pipeline_mode<synchronous>, transform_indices = @transform_3, window_bounds = array<i64: 32, 32>}, {pipeline_mode = #tpu.pipeline_mode<synchronous>, transform_indices = @transform_4, window_bounds = array<i64: 1, 32>}, {pipeline_mode = #tpu.pipeline_mode<synchronous>, transform_indices = @transform_5, window_bounds = array<i64: 32, 8>}, {pipeline_mode = #tpu.pipeline_mode<synchronous>, transform_indices = @transform_6, window_bounds = array<i64: 1, 8>}, {transform_indices = @transform_7, window_bounds = array<i64: 16, 4>}, {transform_indices = @transform_8, window_bounds = array<i64: 16, 1>}]} {
    %c0 = arith.constant 0 : index
    %c0_0 = arith.constant 0 : index
    %0 = vector.load %arg1[%c0, %c0_0] : memref<16x20xf32, #tpu.memory_space<vmem>>, vector<16x16xf32>
    %1 = arith.truncf %0 : vector<16x16xf32> to vector<16x16xbf16>
    %c0_1 = arith.constant 0 : index
    %c0_2 = arith.constant 0 : index
    %2 = vector.load %arg2[%c0_1, %c0_2] : memref<16x32xbf16, #tpu.memory_space<vmem>>, vector<16x32xbf16>
    %cst = arith.constant dense<0.000000e+00> : vector<16x32xf32>
    %3 = tpu.matmul %1, %2, %cst {dimension_numbers = #tpu.dot_dimension_numbers<[1], [0], [0], [1], [0, 0, 1, 1], [], []>} : vector<16x16xbf16>, vector<16x32xbf16>, vector<16x32xf32> -> vector<16x32xf32>
    %c0_3 = arith.constant 0 : index
    %c0_4 = arith.constant 0 : index
    %4 = vector.load %arg3[%c0_3, %c0_4] : memref<1x32xf32, #tpu.memory_space<vmem>>, vector<1x32xf32>
    %5 = vector.broadcast %4 : vector<1x32xf32> to vector<16x32xf32>
    %6 = arith.addf %3, %5 : vector<16x32xf32>
    %cst_5 = arith.constant 0.000000e+00 : f32
    %7 = vector.broadcast %cst_5 : f32 to vector<16x32xf32>
    %8 = arith.maximumf %6, %7 : vector<16x32xf32>
    %9 = arith.truncf %8 : vector<16x32xf32> to vector<16x32xbf16>
    %c0_6 = arith.constant 0 : index
    %c0_7 = arith.constant 0 : index
    %10 = vector.load %arg4[%c0_6, %c0_7] : memref<32x32xbf16, #tpu.memory_space<vmem>>, vector<32x32xbf16>
    %cst_8 = arith.constant dense<0.000000e+00> : vector<16x32xf32>
    %11 = tpu.matmul %9, %10, %cst_8 {dimension_numbers = #tpu.dot_dimension_numbers<[1], [0], [0], [1], [0, 0, 1, 1], [], []>} : vector<16x32xbf16>, vector<32x32xbf16>, vector<16x32xf32> -> vector<16x32xf32>
    %c0_9 = arith.constant 0 : index
    %c0_10 = arith.constant 0 : index
    %12 = vector.load %arg5[%c0_9, %c0_10] : memref<1x32xf32, #tpu.memory_space<vmem>>, vector<1x32xf32>
    %13 = vector.broadcast %12 : vector<1x32xf32> to vector<16x32xf32>
    %14 = arith.addf %11, %13 : vector<16x32xf32>
    %cst_11 = arith.constant 0.000000e+00 : f32
    %15 = vector.broadcast %cst_11 : f32 to vector<16x32xf32>
    %16 = arith.maximumf %14, %15 : vector<16x32xf32>
    %17 = arith.truncf %16 : vector<16x32xf32> to vector<16x32xbf16>
    %c0_12 = arith.constant 0 : index
    %c0_13 = arith.constant 0 : index
    %18 = vector.load %arg6[%c0_12, %c0_13] : memref<32x8xbf16, #tpu.memory_space<vmem>>, vector<32x8xbf16>
    %cst_14 = arith.constant dense<0.000000e+00> : vector<16x8xf32>
    %19 = tpu.matmul %17, %18, %cst_14 {dimension_numbers = #tpu.dot_dimension_numbers<[1], [0], [0], [1], [0, 0, 1, 1], [], []>} : vector<16x32xbf16>, vector<32x8xbf16>, vector<16x8xf32> -> vector<16x8xf32>
    %c0_15 = arith.constant 0 : index
    %c0_16 = arith.constant 0 : index
    %20 = vector.load %arg7[%c0_15, %c0_16] : memref<1x8xf32, #tpu.memory_space<vmem>>, vector<1x8xf32>
    %21 = vector.broadcast %20 : vector<1x8xf32> to vector<16x8xf32>
    %22 = arith.addf %19, %21 : vector<16x8xf32>
    %23 = vector.extract_strided_slice %22 {offsets = [0, 0], sizes = [16, 4], strides = [1, 1]} : vector<16x8xf32> to vector<16x4xf32>
    %24 = vector.extract_strided_slice %22 {offsets = [0, 4], sizes = [16, 4], strides = [1, 1]} : vector<16x8xf32> to vector<16x4xf32>
    %cst_17 = arith.constant -2.000000e+01 : f32
    %cst_18 = arith.constant 2.000000e+00 : f32
    %25 = vector.broadcast %cst_17 : f32 to vector<16x4xf32>
    %26 = arith.maximumf %25, %24 : vector<16x4xf32>
    %27 = vector.broadcast %cst_18 : f32 to vector<16x4xf32>
    %28 = arith.minimumf %27, %26 : vector<16x4xf32>
    %c0_19 = arith.constant 0 : index
    %c16 = arith.constant 16 : index
    %29 = vector.load %arg1[%c0_19, %c16] : memref<16x20xf32, #tpu.memory_space<vmem>>, vector<16x4xf32>
    %30 = math.exp %28 : vector<16x4xf32>
    %31 = arith.mulf %30, %29 : vector<16x4xf32>
    %32 = arith.addf %23, %31 : vector<16x4xf32>
    %33 = math.tanh %32 : vector<16x4xf32>
    %c0_20 = arith.constant 0 : index
    %c0_21 = arith.constant 0 : index
    %34 = vector.load %arg8[%c0_20, %c0_21] : memref<16x4xf32, #tpu.memory_space<vmem>>, vector<16x4xf32>
    tpu.vector_store %arg8[%c0_20, %c0_21], %33 {strides = array<i32>} : memref<16x4xf32, #tpu.memory_space<vmem>>, vector<16x4xf32>,
    %cst_22 = arith.constant -5.000000e-01 : f32
    %35 = vector.broadcast %cst_22 : f32 to vector<16x4xf32>
    %36 = arith.mulf %35, %29 : vector<16x4xf32>
    %37 = arith.mulf %36, %29 : vector<16x4xf32>
    %38 = arith.subf %37, %28 : vector<16x4xf32>
    %cst_23 = arith.constant 0.918938517 : f32
    %39 = vector.broadcast %cst_23 : f32 to vector<16x4xf32>
    %40 = arith.subf %38, %39 : vector<16x4xf32>
    %41 = arith.mulf %33, %33 : vector<16x4xf32>
    %cst_24 = arith.constant 1.000000e+00 : f32
    %42 = vector.broadcast %cst_24 : f32 to vector<16x4xf32>
    %43 = arith.subf %42, %41 : vector<16x4xf32>
    %cst_25 = arith.constant 1.000000e-07 : f32
    %44 = vector.broadcast %cst_25 : f32 to vector<16x4xf32>
    %45 = arith.addf %43, %44 : vector<16x4xf32>
    %46 = math.log %45 : vector<16x4xf32>
    %47 = arith.subf %40, %46 : vector<16x4xf32>
    %cst_26 = arith.constant dense<0.000000e+00> : vector<16xf32>
    %48 = vector.multi_reduction <add>, %47, %cst_26 [1] : vector<16x4xf32> to vector<16xf32>
    %49 = vector.shape_cast %48 : vector<16xf32> to vector<16x1xf32>
    %c0_27 = arith.constant 0 : index
    %c0_28 = arith.constant 0 : index
    %50 = vector.load %arg9[%c0_27, %c0_28] : memref<16x1xf32, #tpu.memory_space<vmem>>, vector<16x1xf32>
    tpu.vector_store %arg9[%c0_27, %c0_28], %49 {strides = array<i32>} : memref<16x1xf32, #tpu.memory_space<vmem>>, vector<16x1xf32>,
    return
  }
  func.func @transform_0(%arg0: i32) -> (i32, i32) {
    %c0_i32 = arith.constant 0 : i32
    %c0_i32_0 = arith.constant 0 : i32
    return %arg0, %c0_i32 : i32, i32
  }
  func.func @transform_1(%arg0: i32) -> (i32, i32) {
    %c0_i32 = arith.constant 0 : i32
    %c0_i32_0 = arith.constant 0 : i32
    %c0_i32_1 = arith.constant 0 : i32
    return %c0_i32, %c0_i32_0 : i32, i32
  }
  func.func @transform_2(%arg0: i32) -> (i32, i32) {
    %c0_i32 = arith.constant 0 : i32
    %c0_i32_0 = arith.constant 0 : i32
    %c0_i32_1 = arith.constant 0 : i32
    return %c0_i32, %c0_i32_0 : i32, i32
  }
  func.func @transform_3(%arg0: i32) -> (i32, i32) {
    %c0_i32 = arith.constant 0 : i32
    %c0_i32_0 = arith.constant 0 : i32
    %c0_i32_1 = arith.constant 0 : i32
    return %c0_i32, %c0_i32_0 : i32, i32
  }
  func.func @transform_4(%arg0: i32) -> (i32, i32) {
    %c0_i32 = arith.constant 0 : i32
    %c0_i32_0 = arith.constant 0 : i32
    %c0_i32_1 = arith.constant 0 : i32
    return %c0_i32, %c0_i32_0 : i32, i32
  }
  func.func @transform_5(%arg0: i32) -> (i32, i32) {
    %c0_i32 = arith.constant 0 : i32
    %c0_i32_0 = arith.constant 0 : i32
    %c0_i32_1 = arith.constant 0 : i32
    return %c0_i32, %c0_i32_0 : i32, i32
  }
  func.func @transform_6(%arg0: i32) -> (i32, i32) {
    %c0_i32 = arith.constant 0 : i32
    %c0_i32_0 = arith.constant 0 : i32
    %c0_i32_1 = arith.constant 0 : i32
    return %c0_i32, %c0_i32_0 : i32, i32
  }
  func.func @transform_7(%arg0: i32) -> (i32, i32) {
    %c0_i32 = arith.constant 0 : i32
    %c0_i32_0 = arith.constant 0 : i32
    return %arg0, %c0_i32 : i32, i32
  }
  func.func @transform_8(%arg0: i32) -> (i32, i32) {
    %c0_i32 = arith.constant 0 : i32
    %c0_i32_0 = arith.constant 0 : i32
    return %arg0, %c0_i32 : i32, i32
  }
}

</mosaic_0001>

<llo_original>
// kernel: actor_sac_forward.1
$region0: #{actor_sac_forward.1}
  #allocation0 [shape = 'u32[]', space=smem, size = 0x4, offset = 0x4, fixed_abs, tag = 'smem constant byte address 0x4 - core index']
  #allocation1 [shape = 'u32[72,128]{1,0:T(1,128)}', space=vmem, size = 0x9000, scoped, tag = 'internal scratch']
  %s0 = inlined_call_operand.vmem [shape: f32[16,20], index: 0, kind: input, shape index: {}]
  %s1 = inlined_call_operand.vmem [shape: bf16[16,32], index: 1, kind: input, shape index: {}]
  %s2 = inlined_call_operand.vmem [shape: f32[1,32], index: 2, kind: input, shape index: {}]
  %s3 = inlined_call_operand.vmem [shape: bf16[32,32], index: 3, kind: input, shape index: {}]
  %s4 = inlined_call_operand.vmem [shape: f32[1,32], index: 4, kind: input, shape index: {}]
  %s5 = inlined_call_operand.vmem [shape: bf16[32,8], index: 5, kind: input, shape index: {}]
  %s6 = inlined_call_operand.vmem [shape: f32[1,8], index: 6, kind: input, shape index: {}]
  %s7 = inlined_call_operand.vmem [shape: f32[16,4], index: 7, kind: output, shape index: {0}]
  %s8 = inlined_call_operand.vmem [shape: f32[16,1], index: 8, kind: output, shape index: {1}]
  %9 = xla_tuple %s7, %s8
  %s10 = sld [smem:[#allocation0]]
  $region46: #{actor_sac_forward.1} parent=0
    _
  %s12 = ssub.s32 1, %s10
  %s13 = scalar_select 0, %s12, %s10
  // Predicated region
  $region2: #{actor_sac_forward.1} parent=0 // pred_check
    _
  $region3: #{actor_sac_forward.1} parent=0 // pred_check_branch
    %15 = sbr.rel (0) target = $region5
  $region4: #{actor_sac_forward.1} parent=0 // pred_region
    _
  $region5: #{actor_sac_forward.1} parent=0 // pred_fallthru
    _
  // Predicated region
  $region6: #{actor_sac_forward.1} parent=0 // pred_check
    _
  $region7: #{actor_sac_forward.1} parent=0 // pred_check_branch
    %17 = sbr.rel (0) target = $region9
  $region8: #{actor_sac_forward.1} parent=0 // pred_region
    _
  $region9: #{actor_sac_forward.1} parent=0 // pred_fallthru
    _
  // Predicated region
  $region10: #{actor_sac_forward.1} parent=0 // pred_check
    _
  $region11: #{actor_sac_forward.1} parent=0 // pred_check_branch
    %19 = sbr.rel (0) target = $region13
  $region12: #{actor_sac_forward.1} parent=0 // pred_region
    _
  $region13: #{actor_sac_forward.1} parent=0 // pred_fallthru
    _
  // Predicated region
  $region14: #{actor_sac_forward.1} parent=0 // pred_check
    _
  $region15: #{actor_sac_forward.1} parent=0 // pred_check_branch
    %21 = sbr.rel (0) target = $region17
  $region16: #{actor_sac_forward.1} parent=0 // pred_region
    _
  $region17: #{actor_sac_forward.1} parent=0 // pred_fallthru
    _
  // Predicated region
  $region18: #{actor_sac_forward.1} parent=0 // pred_check
    _
  $region19: #{actor_sac_forward.1} parent=0 // pred_check_branch
    %23 = sbr.rel (0) target = $region21
  $region20: #{actor_sac_forward.1} parent=0 // pred_region
    _
  $region21: #{actor_sac_forward.1} parent=0 // pred_fallthru
    _
  // Predicated region
  $region22: #{actor_sac_forward.1} parent=0 // pred_check
    _
  $region23: #{actor_sac_forward.1} parent=0 // pred_check_branch
    %25 = sbr.rel (0) target = $region25
  $region24: #{actor_sac_forward.1} parent=0 // pred_region
    _
  $region25: #{actor_sac_forward.1} parent=0 // pred_fallthru
    _
  // Predicated region
  $region26: #{actor_sac_forward.1} parent=0 // pred_check
    _
  $region27: #{actor_sac_forward.1} parent=0 // pred_check_branch
    %27 = sbr.rel (0) target = $region29
  $region28: #{actor_sac_forward.1} parent=0 // pred_region
    _
  $region29: #{actor_sac_forward.1} parent=0 // pred_fallthru
    _
  %v29 = vld [vmem:[%s0] sm:$0xff]
  %v30 = vld [vmem:[%s0 + $0x8] sm:$0xff]
  %v31 = vpack.c.bf16 %v30, %v29
  %v32 = vld [vmem:[%s1] sm:$0xf]
  %v33 = vld [vmem:[%s1 + $0x4] sm:$0xf]
  %v34 = vld [vmem:[%s2] sm:$0x1]
  %v36 = vperm.slane %v34, 0
  %v40 = vunpack.c.l.b16 %v32
  %v41 = vunpack.c.l.b16 %v33
  %v42 = vpack.c.b16 %v41, %v40
  %vm44 = vcmask 130048
  %v46 = vsel %vm44, %v31, 0
  %48 = vmatpush.bf16.msra.mxu0 0
  %49 = vmatpush.bf16.msra.mxu0 0
  %50 = vmatpush.bf16.msra.mxu0 0
  %51 = vmatpush.bf16.msra.mxu0 0
  %52 = vmatpush.bf16.msra.mxu0 0
  %53 = vmatpush.bf16.msra.mxu0 0
  %54 = vmatpush.bf16.msra.mxu0 0
  %55 = vmatpush.bf16.msra.mxu0 %v42
  %56 = vmatmul.bf16.gmra.mxu0 %v46
  %v57 = vpop.f32.mrf.mxu0
  %v58 = vadd.f32 %v36, %v57
  %v59 = vpop.f32.mrf.mxu0
  %v60 = vadd.f32 %v36, %v59
  %61 = vdwg.mxu0
  %v62 = vmax.f32 %v58, 0.0
  %v63 = vmax.f32 %v60, 0.0
  %v64 = vpack.c.bf16 %v63, %v62
  %v65 = vld [vmem:[%s3] sm:$0xf]
  %v66 = vld [vmem:[%s3 + $0x4] sm:$0xf]
  %v67 = vld [vmem:[%s3 + $0x8] sm:$0xf]
  %v68 = vld [vmem:[%s3 + $0xc] sm:$0xf]
  %v69 = vld [vmem:[%s4] sm:$0x1]
  %v71 = vperm.slane %v69, 0
  %v77 = vunpack.c.l.b16 %v65
  %v78 = vunpack.c.l.b16 %v66
  %v79 = vunpack.c.l.b16 %v67
  %v80 = vunpack.c.l.b16 %v68
  %v81 = vpack.c.b16 %v78, %v77
  %v82 = vpack.c.b16 %v80, %v79
  %vm85 = vcmask 261120
  %v87 = vsel %vm85, %v64, 0
  %89 = vmatpush.bf16.msra.mxu0 0
  %90 = vmatpush.bf16.msra.mxu0 0
  %91 = vmatpush.bf16.msra.mxu0 0
  %92 = vmatpush.bf16.msra.mxu0 0
  %93 = vmatpush.bf16.msra.mxu0 0
  %94 = vmatpush.bf16.msra.mxu0 0
  %95 = vmatpush.bf16.msra.mxu0 %v82
  %96 = vmatpush.bf16.msra.mxu0 %v81
  %97 = vmatmul.bf16.gmra.mxu0 %v87
  %v98 = vpop.f32.mrf.mxu0
  %v99 = vadd.f32 %v71, %v98
  %v100 = vpop.f32.mrf.mxu0
  %v101 = vadd.f32 %v71, %v100
  %102 = vdwg.mxu0
  %v103 = vmax.f32 %v99, 0.0
  %v104 = vmax.f32 %v101, 0.0
  %v105 = vpack.c.bf16 %v104, %v103
  %v106 = vld [vmem:[%s5] sm:$0xf]
  %v107 = vld [vmem:[%s5 + $0x4] sm:$0xf]
  %v108 = vld [vmem:[%s5 + $0x8] sm:$0xf]
  %v109 = vld [vmem:[%s5 + $0xc] sm:$0xf]
  %v110 = vld [vmem:[%s6] sm:$0x1]
  %v112 = vperm.slane %v110, 0
  %v118 = vunpack.c.l.b16 %v106
  %v119 = vunpack.c.l.b16 %v107
  %v120 = vunpack.c.l.b16 %v108
  %v121 = vunpack.c.l.b16 %v109
  %v122 = vpack.c.b16 %v119, %v118
  %v123 = vpack.c.b16 %v121, %v120
  %v127 = vsel %vm85, %v105, 0
  %129 = vmatpush.bf16.msra.mxu0 0
  %130 = vmatpush.bf16.msra.mxu0 0
  %131 = vmatpush.bf16.msra.mxu0 0
  %132 = vmatpush.bf16.msra.mxu0 0
  %133 = vmatpush.bf16.msra.mxu0 0
  %134 = vmatpush.bf16.msra.mxu0 0
  %135 = vmatpush.bf16.msra.mxu0 %v123
  %136 = vmatpush.bf16.msra.mxu0 %v122
  %137 = vmatmul.bf16.gmra.mxu0 %v127
  %v138 = vpop.f32.mrf.mxu0
  %v139 = vadd.f32 %v112, %v138
  %v140 = vpop.f32.mrf.mxu0
  %v141 = vadd.f32 %v112, %v140
  %142 = vdwg.mxu0
  %v143 = vmax.f32 %v139, -20.0
  %v144 = vmax.f32 %v141, -20.0
  %v145 = vmin.f32 %v143, 2.0
  %v146 = vmin.f32 %v144, 2.0
  %v147 = vmul.f32 %v145, 1.442695
  %v148 = vpow.pop %v147
  %v149 = vmul.f32 %v146, 1.442695
  %v150 = vpow.pop %v149
  %153 = vrot.lane.b32.xlu0 %v29, 116
  %v154 = vpop.permute.xlu0 %153
  %155 = vrot.lane.b32.xlu0 %v30, 116
  %v156 = vpop.permute.xlu0 %155
  %v159 = vmul.f32 %v148, %v154
  %v160 = vmul.f32 %v150, %v156
  %163 = vrot.lane.b32.xlu0 %v159, 124
  %v164 = vpop.permute.xlu0 %163
  %165 = vrot.lane.b32.xlu0 %v160, 124
  %v166 = vpop.permute.xlu0 %165
  %v169 = vadd.f32 %v139, %v164
  %v170 = vadd.f32 %v141, %v166
  %v171 = vtanh.pop %v169
  %v172 = vtanh.pop %v170
  %vm173 = vcmask 31744
  %174 = vst.msk [vmem:[%s7] sm:$0xff] %vm173, %v171
  %175 = vst.msk [vmem:[%s7 + $0x8] sm:$0xff] %vm173, %v172
  %v176 = vmul.f32 %v29, -0.5
  %v177 = vmul.f32 %v30, -0.5
  %v178 = vmul.f32 %v176, %v29
  %v179 = vmul.f32 %v177, %v30
  %182 = vrot.lane.b32.xlu0 %v145, 12
  %v183 = vpop.permute.xlu0 %182
  %184 = vrot.lane.b32.xlu0 %v146, 12
  %v185 = vpop.permute.xlu0 %184
  %v188 = vsub.f32 %v178, %v183
  %v189 = vsub.f32 %v179, %v185
  %v190 = vsub.f32 %v188, 0.9189385
  %v191 = vsub.f32 %v189, 0.9189385
  %v192 = vmul.f32 %v171, %v171
  %v193 = vmul.f32 %v172, %v172
  %v194 = vsub.f32 1.0, %v192
  %v195 = vsub.f32 1.0, %v193
  %v196 = vadd.f32 %v194, 1e-07
  %v197 = vadd.f32 %v195, 1e-07
  %v198 = vlog2.pop %v196
  %v199 = vmul.f32 %v198, 0.6931472
  %v200 = vlog2.pop %v197
  %v201 = vmul.f32 %v200, 0.6931472
  %204 = vrot.lane.b32.xlu0 %v199, 16
  %v205 = vpop.permute.xlu0 %204
  %206 = vrot.lane.b32.xlu0 %v201, 16
  %v207 = vpop.permute.xlu0 %206
  %v210 = vsub.f32 %v190, %v205
  %v211 = vsub.f32 %v191, %v207
  %214 = vrot.lane.b32.xlu0 %v210, 112
  %v215 = vpop.permute.xlu0 %214
  %216 = vrot.lane.b32.xlu0 %v211, 112
  %v217 = vpop.permute.xlu0 %216
  %v220 = vsel %vm173, %v215, 0.0
  %221 = vadd.xlane.f32.xlu0 %v220
  %v222 = vpop.xlane.xlu0 %221
  %v223 = vsel %vm173, %v217, 0.0
  %224 = vadd.xlane.f32.xlu0 %v223
  %v225 = vpop.xlane.xlu0 %224
  %vm226 = vcmask 7168
  %227 = vst.msk [vmem:[%s8] sm:$0xff] %vm226, %v222
  %228 = vst.msk [vmem:[%s8 + $0x8] sm:$0xff] %vm226, %v225
  // Predicated region
  $region30: #{actor_sac_forward.1} parent=0 // pred_check
    _
  $region31: #{actor_sac_forward.1} parent=0 // pred_check_branch
    %230 = sbr.rel (0) target = $region33
  $region32: #{actor_sac_forward.1} parent=0 // pred_region
    _
  $region33: #{actor_sac_forward.1} parent=0 // pred_fallthru
    _
  // Predicated region
  $region34: #{actor_sac_forward.1} parent=0 // pred_check
    _
  $region35: #{actor_sac_forward.1} parent=0 // pred_check_branch
    %232 = sbr.rel (0) target = $region37
  $region36: #{actor_sac_forward.1} parent=0 // pred_region
    _
  $region37: #{actor_sac_forward.1} parent=0 // pred_fallthru
    _
  // Predicated region
  $region38: #{actor_sac_forward.1} parent=0 // pred_check
    _
  $region39: #{actor_sac_forward.1} parent=0 // pred_check_branch
    %234 = sbr.rel (0) target = $region41
  $region40: #{actor_sac_forward.1} parent=0 // pred_region
    _
  $region41: #{actor_sac_forward.1} parent=0 // pred_fallthru
    _
  // Predicated region
  $region42: #{actor_sac_forward.1} parent=0 // pred_check
    _
  $region43: #{actor_sac_forward.1} parent=0 // pred_check_branch
    %236 = sbr.rel (0) target = $region45
  $region44: #{actor_sac_forward.1} parent=0 // pred_region
    _
  $region45: #{actor_sac_forward.1} parent=0 // pred_fallthru
    _

</llo_original>
